<compile_context>
chip_gen: v5e
topology: v5e:2x2
jax: 0.10.0
libtpu: 0.0.40
codegen_flags: <defaults>
</compile_context>

<pallas_src>
import jax
import jax.numpy as jnp
from jax.experimental import pallas as pl
from jax.experimental.pallas import tpu as pltpu


def critic_kernel(state_ref, action_ref, w1s_ref, w1a_ref, b1_ref,
                  w2_ref, b2_ref, w3_ref, b3_ref, o_ref):
    # bf16 at the MXU inputs, f32 accumulation & elementwise (v5e-safe).
    s = state_ref[...].astype(jnp.bfloat16)
    a = action_ref[...].astype(jnp.bfloat16)

    # Layer 1: fused "concat" via split weights.
    h1 = jnp.dot(s, w1s_ref[...], preferred_element_type=jnp.float32)
    h1 = h1 + jnp.dot(a, w1a_ref[...], preferred_element_type=jnp.float32)
    h1 = jnp.maximum(h1 + b1_ref[...], 0.0)

    # Layer 2.
    h2 = jnp.dot(h1.astype(jnp.bfloat16), w2_ref[...],
                 preferred_element_type=jnp.float32)
    h2 = jnp.maximum(h2 + b2_ref[...], 0.0)

    # Layer 3 (64 -> 1): VPU multiply + lane reduction; avoids a near-empty
    # N=1 MXU pass.  w3_ref is the (1, hidden) row of fc3's weight.
    q = jnp.sum(h2 * w3_ref[...], axis=-1, keepdims=True) + b3_ref[...]
    o_ref[...] = q.astype(o_ref.dtype)


def _round_up(x, m):
    return (x + m - 1) // m * m


# Lane-padded (128-lane) VMEM footprint per batch row per grid step:
# double-buffered state/action/out blocks (~3 KiB/row) + in-kernel f32/bf16
# intermediates (~3 KiB/row before compiler reuse).
_VMEM_BYTES_PER_ROW = 6 * 1024
_VMEM_TILE_BUDGET = 24 << 20          # activations' share of scoped VMEM
_VMEM_LIMIT_CAP = 48 << 20            # <= v7x's 64 MiB physical, with headroom
_MAX_TILE = 4096                      # generation-safe hard cap


def _pick_tile(batch, tile_b):
    """Batch-tile size: multiple of 8, VMEM-safe, >=2 grid steps when possible."""
    rows = _round_up(max(int(batch), 1), 8)
    # Ensure at least two grid steps whenever B > 8 so v7x's two TensorCores
    # both get work; costs one extra ~0.35 us step on single-TC chips.
    two_core_cap = _round_up(pl.cdiv(batch, 2), 8) if batch > 8 else rows
    vmem_cap = _round_up(_VMEM_TILE_BUDGET // _VMEM_BYTES_PER_ROW, 8)
    tile = min(int(tile_b), rows, two_core_cap, vmem_cap, _MAX_TILE)
    return max(_round_up(tile, 8), 8)


def critic_forward(state, action, params, *, tile_b=2048):
    """Pallas-backed Critic.forward.  Returns q of shape (B, 1), float32.

    `state`/`action` may be f32 or bf16 (bf16 halves the dominant HBM read).
    """
    w1s, w1a, b1, w2, b2, w3_row, b3 = params
    B, state_dim = state.shape
    action_dim = action.shape[-1]
    hidden = w2.shape[1]

    tile = _pick_tile(B, tile_b)
    grid = (pl.cdiv(B, tile),)

    # Scoped-VMEM limit sized to the tile (raises v5e's 16 MiB default when
    # needed; never exceeds the v7x-safe 48 MiB cap).
    vmem_limit = int(min(_VMEM_LIMIT_CAP,
                         tile * _VMEM_BYTES_PER_ROW + (4 << 20)))

    def resident(arr):
        # Weights/biases: constant block index -> loaded into VMEM once and
        # kept resident across all batch tiles.
        return pl.BlockSpec(arr.shape, lambda i: (0, 0))

    flops = 2 * B * ((state_dim + action_dim) * hidden + hidden * hidden + hidden)
    bytes_accessed = (
        B * (state_dim * state.dtype.itemsize
             + action_dim * action.dtype.itemsize)
        + sum(int(p.size) * p.dtype.itemsize for p in params)
        + B * 4)

    out = pl.pallas_call(
        critic_kernel,
        out_shape=jax.ShapeDtypeStruct((B, 1), jnp.float32),
        grid=grid,
        in_specs=[
            pl.BlockSpec((tile, state_dim), lambda i: (i, 0)),
            pl.BlockSpec((tile, action_dim), lambda i: (i, 0)),
            resident(w1s),
            resident(w1a),
            resident(b1),
            resident(w2),
            resident(b2),
            resident(w3_row),
            resident(b3),
        ],
        out_specs=pl.BlockSpec((tile, 1), lambda i: (i, 0)),
        compiler_params=pltpu.CompilerParams(
            dimension_semantics=("parallel",),
            vmem_limit_bytes=vmem_limit),
        cost_estimate=pl.CostEstimate(
            flops=int(flops),
            transcendentals=0,
            bytes_accessed=int(bytes_accessed)),
    )(state, action, w1s, w1a, b1, w2, b2, w3_row, b3)
    return out


def init_critic_params(key, state_dim, action_dim, hidden=64):
    """PyTorch nn.Linear-style init (U[-1/sqrt(fan_in), +]), kernel layout."""
    def uniform(k, shape, fan_in):
        bound = 1.0 / (fan_in ** 0.5)
        return jax.random.uniform(k, shape, jnp.float32, -bound, bound)

    k1w, k1b, k2w, k2b, k3w, k3b = jax.random.split(key, 6)
    in_dim = state_dim + action_dim
    w1 = uniform(k1w, (in_dim, hidden), in_dim)
    b1 = uniform(k1b, (1, hidden), in_dim)
    w2 = uniform(k2w, (hidden, hidden), hidden)
    b2 = uniform(k2b, (1, hidden), hidden)
    w3 = uniform(k3w, (hidden, 1), hidden)
    b3 = uniform(k3b, (1, 1), hidden)

    # Kernel layout: W1 split at the state/action boundary (fused concat),
    # matmul weights stored bf16 (MXU-native), biases + fc3 row kept f32.
    w1s = w1[:state_dim].astype(jnp.bfloat16)
    w1a = w1[state_dim:].astype(jnp.bfloat16)
    w2b = w2.astype(jnp.bfloat16)
    w3_row = w3.T  # (1, hidden) row used by the VPU final layer
    return (w1s, w1a, b1, w2b, b2, w3_row, b3)


def critic_reference(state, action, params):
    """Pure-JAX f32 reference using the same (bf16-quantized) weights.

    Note: weights are stored bf16 (and activations are cast to bf16 at the MXU),
    so outputs differ from a true f32 PyTorch Critic at the ~1e-2 level.
    """
    w1s, w1a, b1, w2, b2, w3_row, b3 = params
    x = jnp.concatenate([state, action], axis=-1)
    w1 = jnp.concatenate([w1s, w1a], axis=0).astype(jnp.float32)
    h1 = jnp.maximum(x @ w1 + b1, 0.0)
    h2 = jnp.maximum(h1 @ w2.astype(jnp.float32) + b2, 0.0)
    return h2 @ w3_row.astype(jnp.float32).T + b3


if __name__ == "__main__":
    key = jax.random.PRNGKey(0)
    k_params, k_state, k_action = jax.random.split(key, 3)

    # batch deliberately NOT a tile multiple: exercises the ragged last block
    # (no host-side pad/slice) and the >=2-grid-step (two-TensorCore) path.
    batch = 200
    state_dim = 16
    action_dim = 8

    params = init_critic_params(k_params, state_dim, action_dim)
    state = jax.random.normal(k_state, (batch, state_dim), jnp.float32)
    action = jax.random.normal(k_action, (batch, action_dim), jnp.float32)

    q = critic_forward(state, action, params)
    q = jax.block_until_ready(q)

    q_ref = critic_reference(state, action, params)
    assert q.shape == (batch, 1), q.shape
    # Tolerance covers bf16 rounding of activations at the MXU inputs.
    assert jnp.allclose(q, q_ref, atol=3e-2, rtol=3e-2), (
        float(jnp.max(jnp.abs(q - q_ref))))

    print("KERNEL_OK")
</pallas_src>

<mosaic_0001>
module attributes {stable_mosaic.version = 11 : i64} {
  func.func @critic_kernel(%arg0: i32, %arg1: memref<104x16xf32, #tpu.memory_space<vmem>>, %arg2: memref<104x8xf32, #tpu.memory_space<vmem>>, %arg3: memref<16x64xbf16, #tpu.memory_space<vmem>>, %arg4: memref<8x64xbf16, #tpu.memory_space<vmem>>, %arg5: memref<1x64xf32, #tpu.memory_space<vmem>>, %arg6: memref<64x64xbf16, #tpu.memory_space<vmem>>, %arg7: memref<1x64xf32, #tpu.memory_space<vmem>>, %arg8: memref<1x64xf32, #tpu.memory_space<vmem>>, %arg9: memref<1x1xf32, #tpu.memory_space<vmem>>, %arg10: memref<104x1xf32, #tpu.memory_space<vmem>>) attributes {dimension_semantics = [#tpu.dimension_semantics<parallel>], iteration_bounds = array<i64: 2>, scalar_prefetch = 0 : i64, scratch_operands = 0 : i64, tpu.core_type = #tpu.core_type<tc>, window_params = [{transform_indices = @transform_0, window_bounds = array<i64: 104, 16>}, {transform_indices = @transform_1, window_bounds = array<i64: 104, 8>}, {pipeline_mode = #tpu.pipeline_mode<synchronous>, transform_indices = @transform_2, window_bounds = array<i64: 16, 64>}, {pipeline_mode = #tpu.pipeline_mode<synchronous>, transform_indices = @transform_3, window_bounds = array<i64: 8, 64>}, {pipeline_mode = #tpu.pipeline_mode<synchronous>, transform_indices = @transform_4, window_bounds = array<i64: 1, 64>}, {pipeline_mode = #tpu.pipeline_mode<synchronous>, transform_indices = @transform_5, window_bounds = array<i64: 64, 64>}, {pipeline_mode = #tpu.pipeline_mode<synchronous>, transform_indices = @transform_6, window_bounds = array<i64: 1, 64>}, {pipeline_mode = #tpu.pipeline_mode<synchronous>, transform_indices = @transform_7, window_bounds = array<i64: 1, 64>}, {pipeline_mode = #tpu.pipeline_mode<synchronous>, transform_indices = @transform_8, window_bounds = array<i64: 1, 1>}, {transform_indices = @transform_9, window_bounds = array<i64: 104, 1>}]} {
    %c0 = arith.constant 0 : index
    %c0_0 = arith.constant 0 : index
    %0 = vector.load %arg1[%c0, %c0_0] : memref<104x16xf32, #tpu.memory_space<vmem>>, vector<104x16xf32>
    %1 = arith.truncf %0 : vector<104x16xf32> to vector<104x16xbf16>
    %c0_1 = arith.constant 0 : index
    %c0_2 = arith.constant 0 : index
    %2 = vector.load %arg2[%c0_1, %c0_2] : memref<104x8xf32, #tpu.memory_space<vmem>>, vector<104x8xf32>
    %3 = arith.truncf %2 : vector<104x8xf32> to vector<104x8xbf16>
    %c0_3 = arith.constant 0 : index
    %c0_4 = arith.constant 0 : index
    %4 = vector.load %arg3[%c0_3, %c0_4] : memref<16x64xbf16, #tpu.memory_space<vmem>>, vector<16x64xbf16>
    %cst = arith.constant dense<0.000000e+00> : vector<104x64xf32>
    %5 = tpu.matmul %1, %4, %cst {dimension_numbers = #tpu.dot_dimension_numbers<[1], [0], [0], [1], [0, 0, 1, 1], [], []>} : vector<104x16xbf16>, vector<16x64xbf16>, vector<104x64xf32> -> vector<104x64xf32>
    %c0_5 = arith.constant 0 : index
    %c0_6 = arith.constant 0 : index
    %6 = vector.load %arg4[%c0_5, %c0_6] : memref<8x64xbf16, #tpu.memory_space<vmem>>, vector<8x64xbf16>
    %cst_7 = arith.constant dense<0.000000e+00> : vector<104x64xf32>
    %7 = tpu.matmul %3, %6, %cst_7 {dimension_numbers = #tpu.dot_dimension_numbers<[1], [0], [0], [1], [0, 0, 1, 1], [], []>} : vector<104x8xbf16>, vector<8x64xbf16>, vector<104x64xf32> -> vector<104x64xf32>
    %8 = arith.addf %5, %7 : vector<104x64xf32>
    %c0_8 = arith.constant 0 : index
    %c0_9 = arith.constant 0 : index
    %9 = vector.load %arg5[%c0_8, %c0_9] : memref<1x64xf32, #tpu.memory_space<vmem>>, vector<1x64xf32>
    %10 = vector.broadcast %9 : vector<1x64xf32> to vector<104x64xf32>
    %11 = arith.addf %8, %10 : vector<104x64xf32>
    %cst_10 = arith.constant 0.000000e+00 : f32
    %12 = vector.broadcast %cst_10 : f32 to vector<104x64xf32>
    %13 = arith.maximumf %11, %12 : vector<104x64xf32>
    %14 = arith.truncf %13 : vector<104x64xf32> to vector<104x64xbf16>
    %c0_11 = arith.constant 0 : index
    %c0_12 = arith.constant 0 : index
    %15 = vector.load %arg6[%c0_11, %c0_12] : memref<64x64xbf16, #tpu.memory_space<vmem>>, vector<64x64xbf16>
    %cst_13 = arith.constant dense<0.000000e+00> : vector<104x64xf32>
    %16 = tpu.matmul %14, %15, %cst_13 {dimension_numbers = #tpu.dot_dimension_numbers<[1], [0], [0], [1], [0, 0, 1, 1], [], []>} : vector<104x64xbf16>, vector<64x64xbf16>, vector<104x64xf32> -> vector<104x64xf32>
    %c0_14 = arith.constant 0 : index
    %c0_15 = arith.constant 0 : index
    %17 = vector.load %arg7[%c0_14, %c0_15] : memref<1x64xf32, #tpu.memory_space<vmem>>, vector<1x64xf32>
    %18 = vector.broadcast %17 : vector<1x64xf32> to vector<104x64xf32>
    %19 = arith.addf %16, %18 : vector<104x64xf32>
    %cst_16 = arith.constant 0.000000e+00 : f32
    %20 = vector.broadcast %cst_16 : f32 to vector<104x64xf32>
    %21 = arith.maximumf %19, %20 : vector<104x64xf32>
    %c0_17 = arith.constant 0 : index
    %c0_18 = arith.constant 0 : index
    %22 = vector.load %arg8[%c0_17, %c0_18] : memref<1x64xf32, #tpu.memory_space<vmem>>, vector<1x64xf32>
    %23 = vector.broadcast %22 : vector<1x64xf32> to vector<104x64xf32>
    %24 = arith.mulf %21, %23 : vector<104x64xf32>
    %cst_19 = arith.constant dense<0.000000e+00> : vector<104xf32>
    %25 = vector.multi_reduction <add>, %24, %cst_19 [1] : vector<104x64xf32> to vector<104xf32>
    %26 = vector.shape_cast %25 : vector<104xf32> to vector<104x1xf32>
    %c0_20 = arith.constant 0 : index
    %c0_21 = arith.constant 0 : index
    %27 = vector.load %arg9[%c0_20, %c0_21] : memref<1x1xf32, #tpu.memory_space<vmem>>, vector<1x1xf32>
    %28 = vector.broadcast %27 : vector<1x1xf32> to vector<104x1xf32>
    %29 = arith.addf %26, %28 : vector<104x1xf32>
    %c0_22 = arith.constant 0 : index
    %c0_23 = arith.constant 0 : index
    %30 = vector.load %arg10[%c0_22, %c0_23] : memref<104x1xf32, #tpu.memory_space<vmem>>, vector<104x1xf32>
    tpu.vector_store %arg10[%c0_22, %c0_23], %29 {strides = array<i32>} : memref<104x1xf32, #tpu.memory_space<vmem>>, vector<104x1xf32>,
    return
  }
  func.func @transform_0(%arg0: i32) -> (i32, i32) {
    %c0_i32 = arith.constant 0 : i32
    %c0_i32_0 = arith.constant 0 : i32
    return %arg0, %c0_i32 : i32, i32
  }
  func.func @transform_1(%arg0: i32) -> (i32, i32) {
    %c0_i32 = arith.constant 0 : i32
    %c0_i32_0 = arith.constant 0 : i32
    return %arg0, %c0_i32 : i32, i32
  }
  func.func @transform_2(%arg0: i32) -> (i32, i32) {
    %c0_i32 = arith.constant 0 : i32
    %c0_i32_0 = arith.constant 0 : i32
    %c0_i32_1 = arith.constant 0 : i32
    return %c0_i32, %c0_i32_0 : i32, i32
  }
  func.func @transform_3(%arg0: i32) -> (i32, i32) {
    %c0_i32 = arith.constant 0 : i32
    %c0_i32_0 = arith.constant 0 : i32
    %c0_i32_1 = arith.constant 0 : i32
    return %c0_i32, %c0_i32_0 : i32, i32
  }
  func.func @transform_4(%arg0: i32) -> (i32, i32) {
    %c0_i32 = arith.constant 0 : i32
    %c0_i32_0 = arith.constant 0 : i32
    %c0_i32_1 = arith.constant 0 : i32
    return %c0_i32, %c0_i32_0 : i32, i32
  }
  func.func @transform_5(%arg0: i32) -> (i32, i32) {
    %c0_i32 = arith.constant 0 : i32
    %c0_i32_0 = arith.constant 0 : i32
    %c0_i32_1 = arith.constant 0 : i32
    return %c0_i32, %c0_i32_0 : i32, i32
  }
  func.func @transform_6(%arg0: i32) -> (i32, i32) {
    %c0_i32 = arith.constant 0 : i32
    %c0_i32_0 = arith.constant 0 : i32
    %c0_i32_1 = arith.constant 0 : i32
    return %c0_i32, %c0_i32_0 : i32, i32
  }
  func.func @transform_7(%arg0: i32) -> (i32, i32) {
    %c0_i32 = arith.constant 0 : i32
    %c0_i32_0 = arith.constant 0 : i32
    %c0_i32_1 = arith.constant 0 : i32
    return %c0_i32, %c0_i32_0 : i32, i32
  }
  func.func @transform_8(%arg0: i32) -> (i32, i32) {
    %c0_i32 = arith.constant 0 : i32
    %c0_i32_0 = arith.constant 0 : i32
    %c0_i32_1 = arith.constant 0 : i32
    return %c0_i32, %c0_i32_0 : i32, i32
  }
  func.func @transform_9(%arg0: i32) -> (i32, i32) {
    %c0_i32 = arith.constant 0 : i32
    %c0_i32_0 = arith.constant 0 : i32
    return %arg0, %c0_i32 : i32, i32
  }
}

</mosaic_0001>

<llo_original>
// kernel: tpu_custom_call.1
$region0: #{tpu_custom_call.1}
  #allocation0 [shape = 'u32[]', space=smem, size = 0x4, offset = 0x4, fixed_abs, tag = 'smem constant byte address 0x4 - core index']
  #allocation1 [shape = 'u32[72,128]{1,0:T(1,128)}', space=vmem, size = 0x9000, scoped, tag = 'internal scratch']
  #allocation2 [shape = 'f32[1,1]{1,0:T(1,128)S(1)}', space=vmem, size = 0x200, scoped, tag = 'scoped memory for tpu_custom_call.1']
  %s0 = inlined_call_operand.vmem [shape: f32[200,16], index: 0, kind: input, shape index: {}]
  %s1 = inlined_call_operand.vmem [shape: f32[200,8], index: 1, kind: input, shape index: {}]
  %s2 = inlined_call_operand.vmem [shape: bf16[16,64], index: 2, kind: input, shape index: {}]
  %s3 = inlined_call_operand.vmem [shape: bf16[8,64], index: 3, kind: input, shape index: {}]
  %s4 = inlined_call_operand.vmem [shape: f32[1,64], index: 4, kind: input, shape index: {}]
  %s5 = inlined_call_operand.vmem [shape: bf16[64,64], index: 5, kind: input, shape index: {}]
  %s6 = inlined_call_operand.vmem [shape: f32[1,64], index: 6, kind: input, shape index: {}]
  %s7 = inlined_call_operand.vmem [shape: f32[1,64], index: 7, kind: input, shape index: {}]
  %s8 = inlined_call_operand.<no memory space> [shape: f32[1,1], index: 8, kind: input, shape index: {}]
  %s9 = inlined_call_operand.vmem [shape: f32[200,1], index: 9, kind: output, shape index: {}]
  %s10 = sld [smem:[#allocation0]]
  $region117: #{tpu_custom_call.1} parent=0
    _
  %s12 = ssub.s32 1, %s10
  %s13 = scalar_select 0, %s12, %s10
  %v14 = vstv %s8
  %15 = vst [vmem:[#allocation2] sm:$0x1] %v14
  $region1: #{tpu_custom_call.1} parent=0
    #allocation3 [shape = 'u8[106496]{0}', space=vmem, size = 0x1a000, scoped, tag = 'output window, operand 0']
    loop: start=0, step=1, limit=4
    $region2: #{tpu_custom_call.1} parent=1 // loop_pre_header
      _
    $region3: #{tpu_custom_call.1} parent=1 // loop_header
      %s17 = sphi 0, %s21
      %p18 = scmp.ge.s32.totalorder %s17, 4
      %s27 = sphi 0, %s29
      %s30 = sphi 0, %s27
      %s31 = sphi 0, %s30
      %s47 = sphi 0, %s31
      %s53 = sphi 0, %s55
      %s56 = sphi 0, %s53
      %s57 = sphi 0, %s56
      %s73 = sphi 0, %s57
      %s77 = sphi 0, %s77
      %s79 = sphi 0, %s77
      %s80 = sphi 0, %s79
      %s94 = sphi 0, %s80
      %s98 = sphi 0, %s98
      %s100 = sphi 0, %s98
      %s101 = sphi 0, %s100
      %s115 = sphi 0, %s101
      %s119 = sphi 0, %s119
      %s121 = sphi 0, %s119
      %s122 = sphi 0, %s121
      %s136 = sphi 0, %s122
      %s140 = sphi 0, %s140
      %s142 = sphi 0, %s140
      %s143 = sphi 0, %s142
      %s157 = sphi 0, %s143
      %s161 = sphi 0, %s161
      %s163 = sphi 0, %s161
      %s164 = sphi 0, %s163
      %s178 = sphi 0, %s164
      %s182 = sphi 0, %s182
      %s184 = sphi 0, %s182
      %s185 = sphi 0, %s184
      %s199 = sphi 0, %s185
      %s203 = sphi 0, %s203
      %s205 = sphi 0, %s203
      %s206 = sphi 0, %s205
      %s220 = sphi 0, %s206
      %s226 = sphi 0, %s228
      %s229 = sphi 0, %s226
      %s230 = sphi 0, %s229
      %s246 = sphi 0, %s230
    $region4: #{tpu_custom_call.1} parent=1 // loop_header_branch
      %20 = sbr.rel (%p18) target = $region8
    $region5: #{tpu_custom_call.1} parent=1 // loop_body
      %s22 = ssub.s32 %s17, 1
      %s23 = ssub.s32 %s17, 2
      %s24 = sadd.s32 %s17, 1
      %s25 = ssub.s32 %s17, %s24
      %p26 = scmp.eq.s32.totalorder %s25, 0
      %s28 = sadd.s32 %s27, 1
      %s29 = scalar_select %p26, %s27, %s28
      %p32 = pneg %p26
      %p33 = scmp.eq.s32.totalorder %s17, 1
      %p34 = por %p32, %p33
      %p35 = scmp.ne.s32.totalorder %s27, %s30
      %p36 = scmp.eq.s32.totalorder %s17, 0
      %p37 = por %p35, %p36
      %p38 = scmp.ne.s32.totalorder %s27, %s30
      %p39 = scmp.eq.s32.totalorder %s22, 1
      %p40 = por %p38, %p39
      %p41 = scmp.ne.s32.totalorder %s30, %s31
      %p42 = scmp.eq.s32.totalorder %s22, 0
      %p43 = por %p41, %p42
      %p44 = scmp.ne.s32.totalorder %s30, %s31
      %p45 = scmp.eq.s32.totalorder %s23, 1
      %p46 = por %p44, %p45
      %p48 = scmp.ne.s32.totalorder %s31, %s47
      %p49 = scmp.eq.s32.totalorder %s23, 0
      %p50 = por %p48, %p49
      %s51 = ssub.s32 %s17, %s24
      %p52 = scmp.eq.s32.totalorder %s51, 0
      %s54 = sadd.s32 %s53, 1
      %s55 = scalar_select %p52, %s53, %s54
      %p58 = pneg %p52
      %p59 = scmp.eq.s32.totalorder %s17, 1
      %p60 = por %p58, %p59
      %p61 = scmp.ne.s32.totalorder %s53, %s56
      %p62 = scmp.eq.s32.totalorder %s17, 0
      %p63 = por %p61, %p62
      %p64 = scmp.ne.s32.totalorder %s53, %s56
      %p65 = scmp.eq.s32.totalorder %s22, 1
      %p66 = por %p64, %p65
      %p67 = scmp.ne.s32.totalorder %s56, %s57
      %p68 = scmp.eq.s32.totalorder %s22, 0
      %p69 = por %p67, %p68
      %p70 = scmp.ne.s32.totalorder %s56, %s57
      %p71 = scmp.eq.s32.totalorder %s23, 1
      %p72 = por %p70, %p71
      %p74 = scmp.ne.s32.totalorder %s57, %s73
      %p75 = scmp.eq.s32.totalorder %s23, 0
      %p76 = por %p74, %p75
      %s78 = sadd.s32 %s77, 1
      %p81 = scmp.eq.s32.totalorder %s17, 1
      %p82 = scmp.ne.s32.totalorder %s77, %s79
      %p83 = scmp.eq.s32.totalorder %s17, 0
      %p84 = por %p82, %p83
      %p85 = scmp.ne.s32.totalorder %s77, %s79
      %p86 = scmp.eq.s32.totalorder %s22, 1
      %p87 = por %p85, %p86
      %p88 = scmp.ne.s32.totalorder %s79, %s80
      %p89 = scmp.eq.s32.totalorder %s22, 0
      %p90 = por %p88, %p89
      %p91 = scmp.ne.s32.totalorder %s79, %s80
      %p92 = scmp.eq.s32.totalorder %s23, 1
      %p93 = por %p91, %p92
      %p95 = scmp.ne.s32.totalorder %s80, %s94
      %p96 = scmp.eq.s32.totalorder %s23, 0
      %p97 = por %p95, %p96
      %s99 = sadd.s32 %s98, 1
      %p102 = scmp.eq.s32.totalorder %s17, 1
      %p103 = scmp.ne.s32.totalorder %s98, %s100
      %p104 = scmp.eq.s32.totalorder %s17, 0
      %p105 = por %p103, %p104
      %p106 = scmp.ne.s32.totalorder %s98, %s100
      %p107 = scmp.eq.s32.totalorder %s22, 1
      %p108 = por %p106, %p107
      %p109 = scmp.ne.s32.totalorder %s100, %s101
      %p110 = scmp.eq.s32.totalorder %s22, 0
      %p111 = por %p109, %p110
      %p112 = scmp.ne.s32.totalorder %s100, %s101
      %p113 = scmp.eq.s32.totalorder %s23, 1
      %p114 = por %p112, %p113
      %p116 = scmp.ne.s32.totalorder %s101, %s115
      %p117 = scmp.eq.s32.totalorder %s23, 0
      %p118 = por %p116, %p117
      %s120 = sadd.s32 %s119, 1
      %p123 = scmp.eq.s32.totalorder %s17, 1
      %p124 = scmp.ne.s32.totalorder %s119, %s121
      %p125 = scmp.eq.s32.totalorder %s17, 0
      %p126 = por %p124, %p125
      %p127 = scmp.ne.s32.totalorder %s119, %s121
      %p128 = scmp.eq.s32.totalorder %s22, 1
      %p129 = por %p127, %p128
      %p130 = scmp.ne.s32.totalorder %s121, %s122
      %p131 = scmp.eq.s32.totalorder %s22, 0
      %p132 = por %p130, %p131
      %p133 = scmp.ne.s32.totalorder %s121, %s122
      %p134 = scmp.eq.s32.totalorder %s23, 1
      %p135 = por %p133, %p134
      %p137 = scmp.ne.s32.totalorder %s122, %s136
      %p138 = scmp.eq.s32.totalorder %s23, 0
      %p139 = por %p137, %p138
      %s141 = sadd.s32 %s140, 1
      %p144 = scmp.eq.s32.totalorder %s17, 1
      %p145 = scmp.ne.s32.totalorder %s140, %s142
      %p146 = scmp.eq.s32.totalorder %s17, 0
      %p147 = por %p145, %p146
      %p148 = scmp.ne.s32.totalorder %s140, %s142
      %p149 = scmp.eq.s32.totalorder %s22, 1
      %p150 = por %p148, %p149
      %p151 = scmp.ne.s32.totalorder %s142, %s143
      %p152 = scmp.eq.s32.totalorder %s22, 0
      %p153 = por %p151, %p152
      %p154 = scmp.ne.s32.totalorder %s142, %s143
      %p155 = scmp.eq.s32.totalorder %s23, 1
      %p156 = por %p154, %p155
      %p158 = scmp.ne.s32.totalorder %s143, %s157
      %p159 = scmp.eq.s32.totalorder %s23, 0
      %p160 = por %p158, %p159
      %s162 = sadd.s32 %s161, 1
      %p165 = scmp.eq.s32.totalorder %s17, 1
      %p166 = scmp.ne.s32.totalorder %s161, %s163
      %p167 = scmp.eq.s32.totalorder %s17, 0
      %p168 = por %p166, %p167
      %p169 = scmp.ne.s32.totalorder %s161, %s163
      %p170 = scmp.eq.s32.totalorder %s22, 1
      %p171 = por %p169, %p170
      %p172 = scmp.ne.s32.totalorder %s163, %s164
      %p173 = scmp.eq.s32.totalorder %s22, 0
      %p174 = por %p172, %p173
      %p175 = scmp.ne.s32.totalorder %s163, %s164
      %p176 = scmp.eq.s32.totalorder %s23, 1
      %p177 = por %p175, %p176
      %p179 = scmp.ne.s32.totalorder %s164, %s178
      %p180 = scmp.eq.s32.totalorder %s23, 0
      %p181 = por %p179, %p180
      %s183 = sadd.s32 %s182, 1
      %p186 = scmp.eq.s32.totalorder %s17, 1
      %p187 = scmp.ne.s32.totalorder %s182, %s184
      %p188 = scmp.eq.s32.totalorder %s17, 0
      %p189 = por %p187, %p188
      %p190 = scmp.ne.s32.totalorder %s182, %s184
      %p191 = scmp.eq.s32.totalorder %s22, 1
      %p192 = por %p190, %p191
      %p193 = scmp.ne.s32.totalorder %s184, %s185
      %p194 = scmp.eq.s32.totalorder %s22, 0
      %p195 = por %p193, %p194
      %p196 = scmp.ne.s32.totalorder %s184, %s185
      %p197 = scmp.eq.s32.totalorder %s23, 1
      %p198 = por %p196, %p197
      %p200 = scmp.ne.s32.totalorder %s185, %s199
      %p201 = scmp.eq.s32.totalorder %s23, 0
      %p202 = por %p200, %p201
      %s204 = sadd.s32 %s203, 1
      %p207 = scmp.eq.s32.totalorder %s17, 1
      %p208 = scmp.ne.s32.totalorder %s203, %s205
      %p209 = scmp.eq.s32.totalorder %s17, 0
      %p210 = por %p208, %p209
      %p211 = scmp.ne.s32.totalorder %s203, %s205
      %p212 = scmp.eq.s32.totalorder %s22, 1
      %p213 = por %p211, %p212
      %p214 = scmp.ne.s32.totalorder %s205, %s206
      %p215 = scmp.eq.s32.totalorder %s22, 0
      %p216 = por %p214, %p215
      %p217 = scmp.ne.s32.totalorder %s205, %s206
      %p218 = scmp.eq.s32.totalorder %s23, 1
      %p219 = por %p217, %p218
      %p221 = scmp.ne.s32.totalorder %s206, %s220
      %p222 = scmp.eq.s32.totalorder %s23, 0
      %p223 = por %p221, %p222
      %s224 = ssub.s32 %s17, %s24
      %p225 = scmp.eq.s32.totalorder %s224, 0
      %s227 = sadd.s32 %s226, 1
      %s228 = scalar_select %p225, %s226, %s227
      %p231 = pneg %p225
      %p232 = scmp.eq.s32.totalorder %s17, 1
      %p233 = por %p231, %p232
      %p234 = scmp.ne.s32.totalorder %s226, %s229
      %p235 = scmp.eq.s32.totalorder %s17, 0
      %p236 = por %p234, %p235
      %p237 = scmp.ne.s32.totalorder %s226, %s229
      %p238 = scmp.eq.s32.totalorder %s22, 1
      %p239 = por %p237, %p238
      %p240 = scmp.ne.s32.totalorder %s229, %s230
      %p241 = scmp.eq.s32.totalorder %s22, 0
      %p242 = por %p240, %p241
      %p243 = scmp.ne.s32.totalorder %s229, %s230
      %p244 = scmp.eq.s32.totalorder %s23, 1
      %p245 = por %p243, %p244
      %p247 = scmp.ne.s32.totalorder %s230, %s246
      %p248 = scmp.eq.s32.totalorder %s23, 0
      %p249 = por %p247, %p248
      %p250 = scmp.le.s32.totalorder 1, %s17
      %p251 = scmp.lt.s32.totalorder %s17, 3
      %p252 = pnand %p250, %p251
      %p253 = pneg %p252
      // Predicated region
      $region9: #{tpu_custom_call.1} parent=5 // pred_check
        _
      $region10: #{tpu_custom_call.1} parent=5 // pred_check_branch
        %255 = sbr.rel (%p252) target = $region12
      $region11: #{tpu_custom_call.1} parent=5 // pred_region
        %s256 = ssub.s32 %s17, 1
        // Predicated region
        $region13: #{tpu_custom_call.1} parent=11 // pred_check
          %p257 = pneg %p90
        $region14: #{tpu_custom_call.1} parent=11 // pred_check_branch
          %259 = sbr.rel (%p257) target = $region16
        $region15: #{tpu_custom_call.1} parent=11 // pred_region
          _
        $region16: #{tpu_custom_call.1} parent=11 // pred_fallthru
          _
        // Predicated region
        $region17: #{tpu_custom_call.1} parent=11 // pred_check
          %p260 = pneg %p111
        $region18: #{tpu_custom_call.1} parent=11 // pred_check_branch
          %262 = sbr.rel (%p260) target = $region20
        $region19: #{tpu_custom_call.1} parent=11 // pred_region
          _
        $region20: #{tpu_custom_call.1} parent=11 // pred_fallthru
          _
        // Predicated region
        $region21: #{tpu_custom_call.1} parent=11 // pred_check
          %p263 = pneg %p132
        $region22: #{tpu_custom_call.1} parent=11 // pred_check_branch
          %265 = sbr.rel (%p263) target = $region24
        $region23: #{tpu_custom_call.1} parent=11 // pred_region
          _
        $region24: #{tpu_custom_call.1} parent=11 // pred_fallthru
          _
        // Predicated region
        $region25: #{tpu_custom_call.1} parent=11 // pred_check
          %p266 = pneg %p153
        $region26: #{tpu_custom_call.1} parent=11 // pred_check_branch
          %268 = sbr.rel (%p266) target = $region28
        $region27: #{tpu_custom_call.1} parent=11 // pred_region
          _
        $region28: #{tpu_custom_call.1} parent=11 // pred_fallthru
          _
        // Predicated region
        $region29: #{tpu_custom_call.1} parent=11 // pred_check
          %p269 = pneg %p174
        $region30: #{tpu_custom_call.1} parent=11 // pred_check_branch
          %271 = sbr.rel (%p269) target = $region32
        $region31: #{tpu_custom_call.1} parent=11 // pred_region
          _
        $region32: #{tpu_custom_call.1} parent=11 // pred_fallthru
          _
        // Predicated region
        $region33: #{tpu_custom_call.1} parent=11 // pred_check
          %p272 = pneg %p195
        $region34: #{tpu_custom_call.1} parent=11 // pred_check_branch
          %274 = sbr.rel (%p272) target = $region36
        $region35: #{tpu_custom_call.1} parent=11 // pred_region
          _
        $region36: #{tpu_custom_call.1} parent=11 // pred_fallthru
          _
        // Predicated region
        $region37: #{tpu_custom_call.1} parent=11 // pred_check
          %p275 = pneg %p216
        $region38: #{tpu_custom_call.1} parent=11 // pred_check_branch
          %277 = sbr.rel (%p275) target = $region40
        $region39: #{tpu_custom_call.1} parent=11 // pred_region
          _
        $region40: #{tpu_custom_call.1} parent=11 // pred_fallthru
          _
      $region12: #{tpu_custom_call.1} parent=5 // pred_fallthru
        _
      %p278 = scmp.lt.s32.totalorder %s17, 2
      // Predicated region
      $region41: #{tpu_custom_call.1} parent=5 // pred_check
        %p279 = pneg %p278
      $region42: #{tpu_custom_call.1} parent=5 // pred_check_branch
        %281 = sbr.rel (%p279) target = $region44
      $region43: #{tpu_custom_call.1} parent=5 // pred_region
        // Predicated region
        $region45: #{tpu_custom_call.1} parent=43 // pred_check
          %p282 = pneg %p37
        $region46: #{tpu_custom_call.1} parent=43 // pred_check_branch
          %284 = sbr.rel (%p282) target = $region48
        $region47: #{tpu_custom_call.1} parent=43 // pred_region
          %s285 = smul.u32 13, %s17
          %s286 = ssub.s32 25, %s285
          %p287 = scmp.lt.s32.totalorder %s286, 13
          %s288 = scalar_select %p287, %s286, 13
          %s289 = smul.u32 8, %s288
          %p290 = scmp.lt.s32.totalorder %s285, 24
          %s291 = scalar_select %p290, %s285, 24
          %s292 = smul.addr %s291, 8
          %s293 = scalar_lea.vmem %s0, %s292
          %s294 = smul.u32 13, %s17
          %s295 = ssub.s32 25, %s294
          %p296 = scmp.lt.s32.totalorder %s295, 13
          %s297 = scalar_select %p296, %s295, 13
          %s298 = smul.u32 8, %s297
        $region48: #{tpu_custom_call.1} parent=43 // pred_fallthru
          _
        // Predicated region
        $region49: #{tpu_custom_call.1} parent=43 // pred_check
          %p299 = pneg %p63
        $region50: #{tpu_custom_call.1} parent=43 // pred_check_branch
          %301 = sbr.rel (%p299) target = $region52
        $region51: #{tpu_custom_call.1} parent=43 // pred_region
          %s302 = smul.u32 13, %s17
          %s303 = ssub.s32 25, %s302
          %p304 = scmp.lt.s32.totalorder %s303, 13
          %s305 = scalar_select %p304, %s303, 13
          %s306 = smul.u32 8, %s305
          %p307 = scmp.lt.s32.totalorder %s302, 24
          %s308 = scalar_select %p307, %s302, 24
          %s309 = smul.addr %s308, 8
          %s310 = scalar_lea.vmem %s1, %s309
          %s311 = smul.u32 13, %s17
          %s312 = ssub.s32 25, %s311
          %p313 = scmp.lt.s32.totalorder %s312, 13
          %s314 = scalar_select %p313, %s312, 13
          %s315 = smul.u32 8, %s314
        $region52: #{tpu_custom_call.1} parent=43 // pred_fallthru
          _
      $region44: #{tpu_custom_call.1} parent=5 // pred_fallthru
        _
      %p316 = scmp.le.s32.totalorder 1, %s17
      %p317 = scmp.lt.s32.totalorder %s17, 3
      %p318 = pnand %p316, %p317
      %p319 = pneg %p318
      // Predicated region
      $region53: #{tpu_custom_call.1} parent=5 // pred_check
        _
      $region54: #{tpu_custom_call.1} parent=5 // pred_check_branch
        %321 = sbr.rel (%p318) target = $region56
      $region55: #{tpu_custom_call.1} parent=5 // pred_region
        %s322 = ssub.s32 %s17, 1
        %s323 = smul.u32 13, %s22
        %s324 = ssub.s32 25, %s323
        %p325 = scmp.lt.s32.totalorder %s324, 13
        %s326 = scalar_select %p325, %s324, 13
        %s327 = smul.u32 8, %s326
        %p328 = scmp.lt.s32.totalorder %s323, 24
        %s329 = scalar_select %p328, %s323, 24
        %s330 = smul.addr %s329, 8
        %s331 = scalar_lea.vmem %s0, %s330
        %p332 = pneg %p43
        %p333 = pneg %p40
        %s334 = smul.u32 13, %s22
        %s335 = ssub.s32 25, %s334
        %p336 = scmp.lt.s32.totalorder %s335, 13
        %s337 = scalar_select %p336, %s335, 13
        %s338 = smul.u32 8, %s337
        %p339 = scmp.lt.s32.totalorder %s334, 24
        %s340 = scalar_select %p339, %s334, 24
        %s341 = smul.addr %s340, 8
        %s342 = scalar_lea.vmem %s1, %s341
        %p343 = pneg %p69
        %p344 = pneg %p66
        %p345 = pneg %p90
        %p346 = pneg %p87
        %p347 = pneg %p111
        %p348 = pneg %p108
        %p349 = pneg %p132
        %p350 = pneg %p129
        %p351 = pneg %p153
        %p352 = pneg %p150
        %p353 = pneg %p174
        %p354 = pneg %p171
        %p355 = pneg %p195
        %p356 = pneg %p192
        %p357 = pneg %p216
        %p358 = pneg %p213
        %p359 = pneg %p242
        %p360 = pneg %p239
        %s361 = sand.u32 %s229, 1
        %s362 = sand.u32 %s229, 1
        %s363 = smul.addr %s362, 104
        %s364 = scalar_lea.vmem [#allocation3], %s363
        %s365 = smul.u32 13, %s22
        %s366 = ssub.s32 25, %s365
        %p367 = scmp.lt.s32.totalorder %s366, 13
        %s368 = scalar_select %p367, %s366, 13
        %s369 = smul.u32 8, %s368
        %p370 = scmp.lt.s32.totalorder %s365, 24
        %s371 = scalar_select %p370, %s365, 24
        %s372 = smul.addr %s371, 8
        %s373 = scalar_lea.vmem %s0, %s372
        %s374 = smul.u32 13, %s22
        %s375 = ssub.s32 25, %s374
        %p376 = scmp.lt.s32.totalorder %s375, 13
        %s377 = scalar_select %p376, %s375, 13
        %s378 = smul.u32 8, %s377
        %s379 = smul.u32 13, %s22
        %s380 = ssub.s32 25, %s379
        %p381 = scmp.lt.s32.totalorder %s380, 13
        %s382 = scalar_select %p381, %s380, 13
        %s383 = smul.u32 8, %s382
        %p384 = scmp.lt.s32.totalorder %s379, 24
        %s385 = scalar_select %p384, %s379, 24
        %s386 = smul.addr %s385, 8
        %s387 = scalar_lea.vmem %s1, %s386
        %s388 = smul.u32 13, %s22
        %s389 = ssub.s32 25, %s388
        %p390 = scmp.lt.s32.totalorder %s389, 13
        %s391 = scalar_select %p390, %s389, 13
        %s392 = smul.u32 8, %s391
        %s393 = smul.u32 13, %s22
        %s394 = ssub.s32 25, %s393
        %p395 = scmp.lt.s32.totalorder %s394, 13
        %s396 = scalar_select %p395, %s394, 13
        %s397 = smul.u32 8, %s396
        %v399 = vld [vmem:[%s373] sm:$0xff]
        %v400 = vld [vmem:[%s373 + $0x8] sm:$0xff]
        %v401 = vld [vmem:[%s373 + $0x10] sm:$0xff]
        %v402 = vld [vmem:[%s373 + $0x18] sm:$0xff]
        %v403 = vld [vmem:[%s373 + $0x20] sm:$0xff]
        %v404 = vld [vmem:[%s373 + $0x28] sm:$0xff]
        %v405 = vld [vmem:[%s373 + $0x30] sm:$0xff]
        %v406 = vld [vmem:[%s373 + $0x38] sm:$0xff]
        %v407 = vld [vmem:[%s373 + $0x40] sm:$0xff]
        %v408 = vld [vmem:[%s373 + $0x48] sm:$0xff]
        %v409 = vld [vmem:[%s373 + $0x50] sm:$0xff]
        %v410 = vld [vmem:[%s373 + $0x58] sm:$0xff]
        %v411 = vld [vmem:[%s373 + $0x60] sm:$0xff]
        %v412 = vpack.c.bf16 %v400, %v399
        %v413 = vpack.c.bf16 %v402, %v401
        %v414 = vpack.c.bf16 %v404, %v403
        %v415 = vpack.c.bf16 %v406, %v405
        %v416 = vpack.c.bf16 %v408, %v407
        %v417 = vpack.c.bf16 %v410, %v409
        %v418 = vpack.c.bf16 %v411, %v411
        %v419 = vld [vmem:[%s387] sm:$0xff]
        %v420 = vld [vmem:[%s387 + $0x8] sm:$0xff]
        %v421 = vld [vmem:[%s387 + $0x10] sm:$0xff]
        %v422 = vld [vmem:[%s387 + $0x18] sm:$0xff]
        %v423 = vld [vmem:[%s387 + $0x20] sm:$0xff]
        %v424 = vld [vmem:[%s387 + $0x28] sm:$0xff]
        %v425 = vld [vmem:[%s387 + $0x30] sm:$0xff]
        %v426 = vld [vmem:[%s387 + $0x38] sm:$0xff]
        %v427 = vld [vmem:[%s387 + $0x40] sm:$0xff]
        %v428 = vld [vmem:[%s387 + $0x48] sm:$0xff]
        %v429 = vld [vmem:[%s387 + $0x50] sm:$0xff]
        %v430 = vld [vmem:[%s387 + $0x58] sm:$0xff]
        %v431 = vld [vmem:[%s387 + $0x60] sm:$0xff]
        %v432 = vpack.c.bf16 %v420, %v419
        %v433 = vpack.c.bf16 %v422, %v421
        %v434 = vpack.c.bf16 %v424, %v423
        %v435 = vpack.c.bf16 %v426, %v425
        %v436 = vpack.c.bf16 %v428, %v427
        %v437 = vpack.c.bf16 %v430, %v429
        %v438 = vpack.c.bf16 %v431, %v431
        %v439 = vld [vmem:[%s2] sm:$0xf]
        %v440 = vld [vmem:[%s2 + $0x4] sm:$0xf]
        %v441 = vld [vmem:[%s3] sm:$0xf]
        %vm442 = vcmask 64512
        %v444 = vsel %vm442, %v432, 0
        %v447 = vsel %vm442, %v433, 0
        %v450 = vsel %vm442, %v434, 0
        %v453 = vsel %vm442, %v435, 0
        %v456 = vsel %vm442, %v436, 0
        %v459 = vsel %vm442, %v437, 0
        %v462 = vsel %vm442, %v438, 0
        %vm464 = vcmask 1043456
        %v466 = vsel %vm464, %v441, 0
        %468 = vmatpush.bf16.msra.mxu0 0
        %469 = vmatpush.bf16.msra.mxu0 0
        %470 = vmatpush.bf16.msra.mxu0 0
        %471 = vmatpush.bf16.msra.mxu0 0
        %472 = vmatpush.bf16.msra.mxu0 0
        %473 = vmatpush.bf16.msra.mxu0 0
        %474 = vmatpush.bf16.msra.mxu0 0
        %475 = vmatpush.bf16.msra.mxu0 %v466
        %476 = vmatmul.bf16.gmra.mxu0 %v444
        %v477 = vpop.f32.mrf.mxu0
        %v478 = vadd.f32 0.0, %v477
        %v479 = vpop.f32.mrf.mxu0
        %v480 = vadd.f32 0.0, %v479
        %481 = vmatmul.bf16.gmra.mxu0 %v447
        %v482 = vpop.f32.mrf.mxu0
        %v483 = vadd.f32 0.0, %v482
        %v484 = vpop.f32.mrf.mxu0
        %v485 = vadd.f32 0.0, %v484
        %486 = vmatmul.bf16.gmra.mxu0 %v450
        %v487 = vpop.f32.mrf.mxu0
        %v488 = vadd.f32 0.0, %v487
        %v489 = vpop.f32.mrf.mxu0
        %v490 = vadd.f32 0.0, %v489
        %491 = vmatmul.bf16.gmra.mxu0 %v453
        %v492 = vpop.f32.mrf.mxu0
        %v493 = vadd.f32 0.0, %v492
        %v494 = vpop.f32.mrf.mxu0
        %v495 = vadd.f32 0.0, %v494
        %496 = vmatmul.bf16.gmra.mxu0 %v456
        %v497 = vpop.f32.mrf.mxu0
        %v498 = vadd.f32 0.0, %v497
        %v499 = vpop.f32.mrf.mxu0
        %v500 = vadd.f32 0.0, %v499
        %501 = vmatmul.bf16.gmra.mxu0 %v459
        %v502 = vpop.f32.mrf.mxu0
        %v503 = vadd.f32 0.0, %v502
        %v504 = vpop.f32.mrf.mxu0
        %v505 = vadd.f32 0.0, %v504
        %506 = vmatmul.bf16.gmra.mxu0 %v462
        %v507 = vpop.f32.mrf.mxu0
        %v508 = vadd.f32 0.0, %v507
        %v509 = vpop.f32.mrf.mxu0
        %510 = vdwg.mxu0
        %v513 = vunpack.c.l.b16 %v439
        %v514 = vunpack.c.l.b16 %v440
        %v515 = vpack.c.b16 %v514, %v513
        %vm517 = vcmask 130048
        %v519 = vsel %vm517, %v412, 0
        %v522 = vsel %vm517, %v413, 0
        %v525 = vsel %vm517, %v414, 0
        %v528 = vsel %vm517, %v415, 0
        %v531 = vsel %vm517, %v416, 0
        %v534 = vsel %vm517, %v417, 0
        %v537 = vsel %vm517, %v418, 0
        %539 = vmatpush.bf16.msra.mxu0 0
        %540 = vmatpush.bf16.msra.mxu0 0
        %541 = vmatpush.bf16.msra.mxu0 0
        %542 = vmatpush.bf16.msra.mxu0 0
        %543 = vmatpush.bf16.msra.mxu0 0
        %544 = vmatpush.bf16.msra.mxu0 0
        %545 = vmatpush.bf16.msra.mxu0 0
        %546 = vmatpush.bf16.msra.mxu0 %v515
        %547 = vmatmul.bf16.gmra.mxu0 %v519
        %v548 = vpop.f32.mrf.mxu0
        %v549 = vadd.f32 %v478, %v548
        %v550 = vpop.f32.mrf.mxu0
        %v551 = vadd.f32 %v480, %v550
        %552 = vmatmul.bf16.gmra.mxu0 %v522
        %v553 = vpop.f32.mrf.mxu0
        %v554 = vadd.f32 %v483, %v553
        %v555 = vpop.f32.mrf.mxu0
        %v556 = vadd.f32 %v485, %v555
        %557 = vmatmul.bf16.gmra.mxu0 %v525
        %v558 = vpop.f32.mrf.mxu0
        %v559 = vadd.f32 %v488, %v558
        %v560 = vpop.f32.mrf.mxu0
        %v561 = vadd.f32 %v490, %v560
        %562 = vmatmul.bf16.gmra.mxu0 %v528
        %v563 = vpop.f32.mrf.mxu0
        %v564 = vadd.f32 %v493, %v563
        %v565 = vpop.f32.mrf.mxu0
        %v566 = vadd.f32 %v495, %v565
        %567 = vmatmul.bf16.gmra.mxu0 %v531
        %v568 = vpop.f32.mrf.mxu0
        %v569 = vadd.f32 %v498, %v568
        %v570 = vpop.f32.mrf.mxu0
        %v571 = vadd.f32 %v500, %v570
        %572 = vmatmul.bf16.gmra.mxu0 %v534
        %v573 = vpop.f32.mrf.mxu0
        %v574 = vadd.f32 %v503, %v573
        %v575 = vpop.f32.mrf.mxu0
        %v576 = vadd.f32 %v505, %v575
        %577 = vmatmul.bf16.gmra.mxu0 %v537
        %v578 = vpop.f32.mrf.mxu0
        %v579 = vadd.f32 %v508, %v578
        %v580 = vpop.f32.mrf.mxu0
        %581 = vdwg.mxu0
        %v582 = vld [vmem:[%s4] sm:$0x1]
        %v584 = vperm.slane %v582, 0
        %v586 = vadd.f32 %v549, %v584
        %v587 = vadd.f32 %v551, %v584
        %v588 = vadd.f32 %v554, %v584
        %v589 = vadd.f32 %v556, %v584
        %v590 = vadd.f32 %v559, %v584
        %v591 = vadd.f32 %v561, %v584
        %v592 = vadd.f32 %v564, %v584
        %v593 = vadd.f32 %v566, %v584
        %v594 = vadd.f32 %v569, %v584
        %v595 = vadd.f32 %v571, %v584
        %v596 = vadd.f32 %v574, %v584
        %v597 = vadd.f32 %v576, %v584
        %v598 = vadd.f32 %v579, %v584
        %v599 = vmax.f32 %v586, 0.0
        %v600 = vmax.f32 %v587, 0.0
        %v601 = vmax.f32 %v588, 0.0
        %v602 = vmax.f32 %v589, 0.0
        %v603 = vmax.f32 %v590, 0.0
        %v604 = vmax.f32 %v591, 0.0
        %v605 = vmax.f32 %v592, 0.0
        %v606 = vmax.f32 %v593, 0.0
        %v607 = vmax.f32 %v594, 0.0
        %v608 = vmax.f32 %v595, 0.0
        %v609 = vmax.f32 %v596, 0.0
        %v610 = vmax.f32 %v597, 0.0
        %v611 = vmax.f32 %v598, 0.0
        %v612 = vpack.c.bf16 %v600, %v599
        %v613 = vpack.c.bf16 %v602, %v601
        %v614 = vpack.c.bf16 %v604, %v603
        %v615 = vpack.c.bf16 %v606, %v605
        %v616 = vpack.c.bf16 %v608, %v607
        %v617 = vpack.c.bf16 %v610, %v609
        %v618 = vpack.c.bf16 %v611, %v611
        %v619 = vld [vmem:[%s5] sm:$0xf]
        %v620 = vld [vmem:[%s5 + $0x4] sm:$0xf]
        %v621 = vld [vmem:[%s5 + $0x8] sm:$0xf]
        %v622 = vld [vmem:[%s5 + $0xc] sm:$0xf]
        %v623 = vld [vmem:[%s5 + $0x10] sm:$0xf]
        %v624 = vld [vmem:[%s5 + $0x14] sm:$0xf]
        %v625 = vld [vmem:[%s5 + $0x18] sm:$0xf]
        %v626 = vld [vmem:[%s5 + $0x1c] sm:$0xf]
        %v627 = vld [vmem:[%s6] sm:$0x1]
        %v629 = vperm.slane %v627, 0
        %v639 = vunpack.c.l.b16 %v619
        %v640 = vunpack.c.l.b16 %v620
        %v641 = vunpack.c.l.b16 %v621
        %v642 = vunpack.c.l.b16 %v622
        %v643 = vunpack.c.l.b16 %v623
        %v644 = vunpack.c.l.b16 %v624
        %v645 = vunpack.c.l.b16 %v625
        %v646 = vunpack.c.l.b16 %v626
        %v647 = vpack.c.b16 %v640, %v639
        %v648 = vpack.c.b16 %v642, %v641
        %v649 = vpack.c.b16 %v644, %v643
        %v650 = vpack.c.b16 %v646, %v645
        %vm655 = vcmask 523264
        %v657 = vsel %vm655, %v612, 0
        %v660 = vsel %vm655, %v613, 0
        %v663 = vsel %vm655, %v614, 0
        %v666 = vsel %vm655, %v615, 0
        %v669 = vsel %vm655, %v616, 0
        %v672 = vsel %vm655, %v617, 0
        %v675 = vsel %vm655, %v618, 0
        %677 = vmatpush.bf16.msra.mxu0 0
        %678 = vmatpush.bf16.msra.mxu0 0
        %679 = vmatpush.bf16.msra.mxu0 0
        %680 = vmatpush.bf16.msra.mxu0 0
        %681 = vmatpush.bf16.msra.mxu0 %v650
        %682 = vmatpush.bf16.msra.mxu0 %v649
        %683 = vmatpush.bf16.msra.mxu0 %v648
        %684 = vmatpush.bf16.msra.mxu0 %v647
        %685 = vmatmul.bf16.gmra.mxu0 %v657
        %v686 = vpop.f32.mrf.mxu0
        %v687 = vadd.f32 %v629, %v686
        %v688 = vpop.f32.mrf.mxu0
        %v689 = vadd.f32 %v629, %v688
        %690 = vmatmul.bf16.gmra.mxu0 %v660
        %v691 = vpop.f32.mrf.mxu0
        %v692 = vadd.f32 %v629, %v691
        %v693 = vpop.f32.mrf.mxu0
        %v694 = vadd.f32 %v629, %v693
        %695 = vmatmul.bf16.gmra.mxu0 %v663
        %v696 = vpop.f32.mrf.mxu0
        %v697 = vadd.f32 %v629, %v696
        %v698 = vpop.f32.mrf.mxu0
        %v699 = vadd.f32 %v629, %v698
        %700 = vmatmul.bf16.gmra.mxu0 %v666
        %v701 = vpop.f32.mrf.mxu0
        %v702 = vadd.f32 %v629, %v701
        %v703 = vpop.f32.mrf.mxu0
        %v704 = vadd.f32 %v629, %v703
        %705 = vmatmul.bf16.gmra.mxu0 %v669
        %v706 = vpop.f32.mrf.mxu0
        %v707 = vadd.f32 %v629, %v706
        %v708 = vpop.f32.mrf.mxu0
        %v709 = vadd.f32 %v629, %v708
        %710 = vmatmul.bf16.gmra.mxu0 %v672
        %v711 = vpop.f32.mrf.mxu0
        %v712 = vadd.f32 %v629, %v711
        %v713 = vpop.f32.mrf.mxu0
        %v714 = vadd.f32 %v629, %v713
        %715 = vmatmul.bf16.gmra.mxu0 %v675
        %v716 = vpop.f32.mrf.mxu0
        %v717 = vadd.f32 %v629, %v716
        %v718 = vpop.f32.mrf.mxu0
        %719 = vdwg.mxu0
        %v720 = vmax.f32 %v687, 0.0
        %v721 = vmax.f32 %v689, 0.0
        %v722 = vmax.f32 %v692, 0.0
        %v723 = vmax.f32 %v694, 0.0
        %v724 = vmax.f32 %v697, 0.0
        %v725 = vmax.f32 %v699, 0.0
        %v726 = vmax.f32 %v702, 0.0
        %v727 = vmax.f32 %v704, 0.0
        %v728 = vmax.f32 %v707, 0.0
        %v729 = vmax.f32 %v709, 0.0
        %v730 = vmax.f32 %v712, 0.0
        %v731 = vmax.f32 %v714, 0.0
        %v732 = vmax.f32 %v717, 0.0
        %v733 = vld [vmem:[%s7] sm:$0x1]
        %v735 = vperm.slane %v733, 0
        %v737 = vmul.f32 %v720, %v735
        %v738 = vmul.f32 %v721, %v735
        %v739 = vmul.f32 %v722, %v735
        %v740 = vmul.f32 %v723, %v735
        %v741 = vmul.f32 %v724, %v735
        %v742 = vmul.f32 %v725, %v735
        %v743 = vmul.f32 %v726, %v735
        %v744 = vmul.f32 %v727, %v735
        %v745 = vmul.f32 %v728, %v735
        %v746 = vmul.f32 %v729, %v735
        %v747 = vmul.f32 %v730, %v735
        %v748 = vmul.f32 %v731, %v735
        %v749 = vmul.f32 %v732, %v735
        %v750 = vsel %vm655, %v737, 0.0
        %751 = vadd.xlane.f32.xlu0 %v750
        %v752 = vpop.xlane.xlu0 %751
        %v753 = vsel %vm655, %v738, 0.0
        %754 = vadd.xlane.f32.xlu0 %v753
        %v755 = vpop.xlane.xlu0 %754
        %v756 = vsel %vm655, %v739, 0.0
        %757 = vadd.xlane.f32.xlu0 %v756
        %v758 = vpop.xlane.xlu0 %757
        %v759 = vsel %vm655, %v740, 0.0
        %760 = vadd.xlane.f32.xlu0 %v759
        %v761 = vpop.xlane.xlu0 %760
        %v762 = vsel %vm655, %v741, 0.0
        %763 = vadd.xlane.f32.xlu0 %v762
        %v764 = vpop.xlane.xlu0 %763
        %v765 = vsel %vm655, %v742, 0.0
        %766 = vadd.xlane.f32.xlu0 %v765
        %v767 = vpop.xlane.xlu0 %766
        %v768 = vsel %vm655, %v743, 0.0
        %769 = vadd.xlane.f32.xlu0 %v768
        %v770 = vpop.xlane.xlu0 %769
        %v771 = vsel %vm655, %v744, 0.0
        %772 = vadd.xlane.f32.xlu0 %v771
        %v773 = vpop.xlane.xlu0 %772
        %v774 = vsel %vm655, %v745, 0.0
        %775 = vadd.xlane.f32.xlu0 %v774
        %v776 = vpop.xlane.xlu0 %775
        %v777 = vsel %vm655, %v746, 0.0
        %778 = vadd.xlane.f32.xlu0 %v777
        %v779 = vpop.xlane.xlu0 %778
        %v780 = vsel %vm655, %v747, 0.0
        %781 = vadd.xlane.f32.xlu0 %v780
        %v782 = vpop.xlane.xlu0 %781
        %v783 = vsel %vm655, %v748, 0.0
        %784 = vadd.xlane.f32.xlu0 %v783
        %v785 = vpop.xlane.xlu0 %784
        %v786 = vsel %vm655, %v749, 0.0
        %787 = vadd.xlane.f32.xlu0 %v786
        %v788 = vpop.xlane.xlu0 %787
        %v789 = vld [vmem:[#allocation2] sm:$0x1]
        %v791 = vperm.slane %v789, 0
        %v793 = vadd.f32 %v752, %v791
        %v794 = vadd.f32 %v755, %v791
        %v795 = vadd.f32 %v758, %v791
        %v796 = vadd.f32 %v761, %v791
        %v797 = vadd.f32 %v764, %v791
        %v798 = vadd.f32 %v767, %v791
        %v799 = vadd.f32 %v770, %v791
        %v800 = vadd.f32 %v773, %v791
        %v801 = vadd.f32 %v776, %v791
        %v802 = vadd.f32 %v779, %v791
        %v803 = vadd.f32 %v782, %v791
        %v804 = vadd.f32 %v785, %v791
        %v805 = vadd.f32 %v788, %v791
        %vm806 = vcmask 7168
        %807 = vst.msk [vmem:[%s364] sm:$0xff] %vm806, %v793
        %808 = vst.msk [vmem:[%s364 + $0x8] sm:$0xff] %vm806, %v794
        %809 = vst.msk [vmem:[%s364 + $0x10] sm:$0xff] %vm806, %v795
        %810 = vst.msk [vmem:[%s364 + $0x18] sm:$0xff] %vm806, %v796
        %811 = vst.msk [vmem:[%s364 + $0x20] sm:$0xff] %vm806, %v797
        %812 = vst.msk [vmem:[%s364 + $0x28] sm:$0xff] %vm806, %v798
        %813 = vst.msk [vmem:[%s364 + $0x30] sm:$0xff] %vm806, %v799
        %814 = vst.msk [vmem:[%s364 + $0x38] sm:$0xff] %vm806, %v800
        %815 = vst.msk [vmem:[%s364 + $0x40] sm:$0xff] %vm806, %v801
        %816 = vst.msk [vmem:[%s364 + $0x48] sm:$0xff] %vm806, %v802
        %817 = vst.msk [vmem:[%s364 + $0x50] sm:$0xff] %vm806, %v803
        %818 = vst.msk [vmem:[%s364 + $0x58] sm:$0xff] %vm806, %v804
        %819 = vst.msk [vmem:[%s364 + $0x60] sm:$0xff] %vm806, %v805
        %s820 = sand.u32 %s229, 1
        %s821 = sand.u32 %s229, 1
        %s822 = smul.addr %s821, 104
        %s823 = scalar_lea.vmem [#allocation3], %s822
        // Predicated region
        $region57: #{tpu_custom_call.1} parent=55 // pred_check
          %p824 = pneg %p239
        $region58: #{tpu_custom_call.1} parent=55 // pred_check_branch
          %826 = sbr.rel (%p824) target = $region60
        $region59: #{tpu_custom_call.1} parent=55 // pred_region
          %s827 = smul.u32 13, %s22
          %s828 = ssub.s32 25, %s827
          %p829 = scmp.lt.s32.totalorder %s828, 13
          %s830 = scalar_select %p829, %s828, 13
          %s831 = smul.u32 8, %s830
          %p832 = scmp.ne.s32.totalorder 0, %s831
          %s833 = smul.addr %s827, 8
          %s834 = scalar_lea.vmem %s9, %s833
          // Predicated region
          $region61: #{tpu_custom_call.1} parent=59 // pred_check
            %p835 = pneg %p832
          $region62: #{tpu_custom_call.1} parent=59 // pred_check_branch
            %837 = sbr.rel (%p835) target = $region64
          $region63: #{tpu_custom_call.1} parent=59 // pred_region
            // Predicated region
            $region65: #{tpu_custom_call.1} parent=63 // pred_check
              _
            $region66: #{tpu_custom_call.1} parent=63 // pred_check_branch
              %839 = sbr.rel (0) target = $region68
            $region67: #{tpu_custom_call.1} parent=63 // pred_region
              // Predicated region
              $region87: #{tpu_custom_call.1} parent=67 // pred_check
                _
              $region88: #{tpu_custom_call.1} parent=67 // pred_check_branch
                %914 = sbr.rel (0) target = $region90
              $region89: #{tpu_custom_call.1} parent=67 // pred_region
                %s915 = sdiv.u32.pop %s830, 13
                %s916 = srem.u32.pop %s830, 13
                // While loop
                $region91: #{tpu_custom_call.1} parent=89 // loop_pre_header
                  _
                $region92: #{tpu_custom_call.1} parent=89 // loop_header
                  %s918 = sphi 0, %s920
                  %p919 = scmp.ge.s32.totalorder %s918, %s915
                  %s923 = sphi 0, %s954
                  %s924 = sphi %s823, %s957
                  %s925 = sphi %s834, %s958
                $region93: #{tpu_custom_call.1} parent=89 // loop_header_branch
                  %922 = sbr.rel (%p919) target = $region97
                $region94: #{tpu_custom_call.1} parent=89 // loop_body
                  %v926 = vld [vmem:[%s924] sm:$0xff]
                  %927 = vst [vmem:[%s925] sm:$0xff] %v926
                  %v928 = vld [vmem:[%s924 + $0x8] sm:$0xff]
                  %929 = vst [vmem:[%s925 + $0x8] sm:$0xff] %v928
                  %v930 = vld [vmem:[%s924 + $0x10] sm:$0xff]
                  %931 = vst [vmem:[%s925 + $0x10] sm:$0xff] %v930
                  %v932 = vld [vmem:[%s924 + $0x18] sm:$0xff]
                  %933 = vst [vmem:[%s925 + $0x18] sm:$0xff] %v932
                  %v934 = vld [vmem:[%s924 + $0x20] sm:$0xff]
                  %935 = vst [vmem:[%s925 + $0x20] sm:$0xff] %v934
                  %v936 = vld [vmem:[%s924 + $0x28] sm:$0xff]
                  %937 = vst [vmem:[%s925 + $0x28] sm:$0xff] %v936
                  %v938 = vld [vmem:[%s924 + $0x30] sm:$0xff]
                  %939 = vst [vmem:[%s925 + $0x30] sm:$0xff] %v938
                  %v940 = vld [vmem:[%s924 + $0x38] sm:$0xff]
                  %941 = vst [vmem:[%s925 + $0x38] sm:$0xff] %v940
                  %v942 = vld [vmem:[%s924 + $0x40] sm:$0xff]
                  %943 = vst [vmem:[%s925 + $0x40] sm:$0xff] %v942
                  %v944 = vld [vmem:[%s924 + $0x48] sm:$0xff]
                  %945 = vst [vmem:[%s925 + $0x48] sm:$0xff] %v944
                  %v946 = vld [vmem:[%s924 + $0x50] sm:$0xff]
                  %947 = vst [vmem:[%s925 + $0x50] sm:$0xff] %v946
                  %v948 = vld [vmem:[%s924 + $0x58] sm:$0xff]
                  %949 = vst [vmem:[%s925 + $0x58] sm:$0xff] %v948
                  %v950 = vld [vmem:[%s924 + $0x60] sm:$0xff]
                  %951 = vst [vmem:[%s925 + $0x60] sm:$0xff] %v950
                  %s952 = sadd.s32 1, %s923
                  %p953 = scmp.ge.s32.totalorder %s952, %s915
                  %s954 = scalar_select %p953, 0, %s952
                  %s955 = smul.u32 %s954, 104
                  %s956 = smul.u32 %s954, 104
                  %s957 = scalar_lea.vmem %s823, %s955 [#allocation3]
                  %s958 = scalar_lea.vmem %s834, %s956
                $region95: #{tpu_custom_call.1} parent=89 // loop_footer
                  %s920 = sadd.s32 %s918, 1
                $region96: #{tpu_custom_call.1} parent=89 // loop_footer_branch
                  %917 = sbr.rel target = $region92
                $region97: #{tpu_custom_call.1} parent=89 // loop_exit
                  _
                %s959 = sdiv.u32.pop %s830, 13
                %s960 = srem.u32.pop %s830, 13
                %s961 = smul.u32 %s959, 13
                %s962 = smul.u32 8, %s961
                %s963 = scalar_lea.vmem %s823, %s962 [#allocation3]
                %s964 = smul.u32 8, %s961
                %s965 = scalar_lea.vmem %s834, %s964
                // While loop
                $region98: #{tpu_custom_call.1} parent=89 // loop_pre_header
                  _
                $region99: #{tpu_custom_call.1} parent=89 // loop_header
                  %s967 = sphi 0, %s969
                  %p968 = scmp.ge.s32.totalorder %s967, %s960
                  %s972 = sphi 0, %s979
                  %s973 = sphi %s963, %s982
                  %s974 = sphi %s965, %s983
                $region100: #{tpu_custom_call.1} parent=89 // loop_header_branch
                  %971 = sbr.rel (%p968) target = $region104
                $region101: #{tpu_custom_call.1} parent=89 // loop_body
                  %v975 = vld [vmem:[%s973] sm:$0xff]
                  %976 = vst [vmem:[%s974] sm:$0xff] %v975
                  %s977 = sadd.s32 1, %s972
                  %p978 = scmp.ge.s32.totalorder %s977, %s960
                  %s979 = scalar_select %p978, 0, %s977
                  %s980 = smul.u32 %s979, 8
                  %s981 = smul.u32 %s979, 8
                  %s982 = scalar_lea.vmem %s963, %s980 [#allocation3]
                  %s983 = scalar_lea.vmem %s965, %s981
                $region102: #{tpu_custom_call.1} parent=89 // loop_footer
                  %s969 = sadd.s32 %s967, 1
                $region103: #{tpu_custom_call.1} parent=89 // loop_footer_branch
                  %966 = sbr.rel target = $region99
                $region104: #{tpu_custom_call.1} parent=89 // loop_exit
                  _
              $region90: #{tpu_custom_call.1} parent=67 // pred_fallthru
                _
              // Predicated region
              $region105: #{tpu_custom_call.1} parent=67 // pred_check
                _
              $region106: #{tpu_custom_call.1} parent=67 // pred_check_branch
                %985 = sbr.rel target = $region108
              $region107: #{tpu_custom_call.1} parent=67 // pred_region
                _
              $region108: #{tpu_custom_call.1} parent=67 // pred_fallthru
                _
            $region68: #{tpu_custom_call.1} parent=63 // pred_fallthru
              _
            // Predicated region
            $region69: #{tpu_custom_call.1} parent=63 // pred_check
              _
            $region70: #{tpu_custom_call.1} parent=63 // pred_check_branch
              %841 = sbr.rel target = $region72
            $region71: #{tpu_custom_call.1} parent=63 // pred_region
              %s843 = ssub.s32 256, 1
              %s844 = sdiv.u32.pop %s830, 13
              %s845 = srem.u32.pop %s830, 13
              // While loop
              $region73: #{tpu_custom_call.1} parent=71 // loop_pre_header
                _
              $region74: #{tpu_custom_call.1} parent=71 // loop_header
                %s847 = sphi 0, %s849
                %p848 = scmp.ge.s32.totalorder %s847, %s844
                %s852 = sphi 0, %s883
                %s853 = sphi %s823, %s886
                %s854 = sphi %s834, %s887
              $region75: #{tpu_custom_call.1} parent=71 // loop_header_branch
                %851 = sbr.rel (%p848) target = $region79
              $region76: #{tpu_custom_call.1} parent=71 // loop_body
                %v855 = vld [vmem:[%s853] sm:%s843]
                %856 = vst [vmem:[%s854] sm:%s843] %v855
                %v857 = vld [vmem:[%s853 + $0x8] sm:%s843]
                %858 = vst [vmem:[%s854 + $0x8] sm:%s843] %v857
                %v859 = vld [vmem:[%s853 + $0x10] sm:%s843]
                %860 = vst [vmem:[%s854 + $0x10] sm:%s843] %v859
                %v861 = vld [vmem:[%s853 + $0x18] sm:%s843]
                %862 = vst [vmem:[%s854 + $0x18] sm:%s843] %v861
                %v863 = vld [vmem:[%s853 + $0x20] sm:%s843]
                %864 = vst [vmem:[%s854 + $0x20] sm:%s843] %v863
                %v865 = vld [vmem:[%s853 + $0x28] sm:%s843]
                %866 = vst [vmem:[%s854 + $0x28] sm:%s843] %v865
                %v867 = vld [vmem:[%s853 + $0x30] sm:%s843]
                %868 = vst [vmem:[%s854 + $0x30] sm:%s843] %v867
                %v869 = vld [vmem:[%s853 + $0x38] sm:%s843]
                %870 = vst [vmem:[%s854 + $0x38] sm:%s843] %v869
                %v871 = vld [vmem:[%s853 + $0x40] sm:%s843]
                %872 = vst [vmem:[%s854 + $0x40] sm:%s843] %v871
                %v873 = vld [vmem:[%s853 + $0x48] sm:%s843]
                %874 = vst [vmem:[%s854 + $0x48] sm:%s843] %v873
                %v875 = vld [vmem:[%s853 + $0x50] sm:%s843]
                %876 = vst [vmem:[%s854 + $0x50] sm:%s843] %v875
                %v877 = vld [vmem:[%s853 + $0x58] sm:%s843]
                %878 = vst [vmem:[%s854 + $0x58] sm:%s843] %v877
                %v879 = vld [vmem:[%s853 + $0x60] sm:%s843]
                %880 = vst [vmem:[%s854 + $0x60] sm:%s843] %v879
                %s881 = sadd.s32 1, %s852
                %p882 = scmp.ge.s32.totalorder %s881, %s844
                %s883 = scalar_select %p882, 0, %s881
                %s884 = smul.u32 %s883, 104
                %s885 = smul.u32 %s883, 104
                %s886 = scalar_lea.vmem %s823, %s884 [#allocation3]
                %s887 = scalar_lea.vmem %s834, %s885
              $region77: #{tpu_custom_call.1} parent=71 // loop_footer
                %s849 = sadd.s32 %s847, 1
              $region78: #{tpu_custom_call.1} parent=71 // loop_footer_branch
                %846 = sbr.rel target = $region74
              $region79: #{tpu_custom_call.1} parent=71 // loop_exit
                _
              %s888 = sdiv.u32.pop %s830, 13
              %s889 = srem.u32.pop %s830, 13
              %s890 = smul.u32 %s888, 13
              %s891 = smul.u32 8, %s890
              %s892 = scalar_lea.vmem %s823, %s891 [#allocation3]
              %s893 = smul.u32 8, %s890
              %s894 = scalar_lea.vmem %s834, %s893
              // While loop
              $region80: #{tpu_custom_call.1} parent=71 // loop_pre_header
                _
              $region81: #{tpu_custom_call.1} parent=71 // loop_header
                %s896 = sphi 0, %s898
                %p897 = scmp.ge.s32.totalorder %s896, %s889
                %s901 = sphi 0, %s908
                %s902 = sphi %s892, %s911
                %s903 = sphi %s894, %s912
              $region82: #{tpu_custom_call.1} parent=71 // loop_header_branch
                %900 = sbr.rel (%p897) target = $region86
              $region83: #{tpu_custom_call.1} parent=71 // loop_body
                %v904 = vld [vmem:[%s902] sm:%s843]
                %905 = vst [vmem:[%s903] sm:%s843] %v904
                %s906 = sadd.s32 1, %s901
                %p907 = scmp.ge.s32.totalorder %s906, %s889
                %s908 = scalar_select %p907, 0, %s906
                %s909 = smul.u32 %s908, 8
                %s910 = smul.u32 %s908, 8
                %s911 = scalar_lea.vmem %s892, %s909 [#allocation3]
                %s912 = scalar_lea.vmem %s894, %s910
              $region84: #{tpu_custom_call.1} parent=71 // loop_footer
                %s898 = sadd.s32 %s896, 1
              $region85: #{tpu_custom_call.1} parent=71 // loop_footer_branch
                %895 = sbr.rel target = $region81
              $region86: #{tpu_custom_call.1} parent=71 // loop_exit
                _
            $region72: #{tpu_custom_call.1} parent=63 // pred_fallthru
              _
          $region64: #{tpu_custom_call.1} parent=59 // pred_fallthru
            _
          %986 = vnop
        $region60: #{tpu_custom_call.1} parent=55 // pred_fallthru
          _
      $region56: #{tpu_custom_call.1} parent=5 // pred_fallthru
        _
      %p987 = scmp.le.s32.totalorder 2, %s17
      // Predicated region
      $region109: #{tpu_custom_call.1} parent=5 // pred_check
        %p988 = pneg %p987
      $region110: #{tpu_custom_call.1} parent=5 // pred_check_branch
        %990 = sbr.rel (%p988) target = $region112
      $region111: #{tpu_custom_call.1} parent=5 // pred_region
        %s991 = ssub.s32 %s17, 2
        // Predicated region
        $region113: #{tpu_custom_call.1} parent=111 // pred_check
          %p992 = pneg %p245
        $region114: #{tpu_custom_call.1} parent=111 // pred_check_branch
          %994 = sbr.rel (%p992) target = $region116
        $region115: #{tpu_custom_call.1} parent=111 // pred_region
          %s995 = sand.u32 %s230, 1
          %s996 = sand.u32 %s230, 1
          %s997 = smul.addr %s996, 104
          %s998 = scalar_lea.vmem [#allocation3], %s997
        $region116: #{tpu_custom_call.1} parent=111 // pred_fallthru
          _
      $region112: #{tpu_custom_call.1} parent=5 // pred_fallthru
        _
    $region6: #{tpu_custom_call.1} parent=1 // loop_footer
      %s21 = sadd.s32 1, %s17
    $region7: #{tpu_custom_call.1} parent=1 // loop_footer_branch
      %16 = sbr.rel target = $region3
    $region8: #{tpu_custom_call.1} parent=1 // loop_exit
      _

</llo_original>
